<compile_context>
chip_gen: v7x
topology: tpu7x:2x2x1
jax: 0.10.0
libtpu: 0.0.40
codegen_flags: <defaults>
</compile_context>

<pallas_src>
import functools

import jax
import jax.numpy as jnp
from jax import lax
from jax.experimental import pallas as pl
from jax.experimental.pallas import tpu as pltpu

_B1, _B2, _ADAM_EPS = 0.9, 0.999, 1e-8
_COS_EPS = 1e-16


# ----------------------------------------------------------------------------
# Pallas kernel: full in-kernel training (unrolled Adam) + final transform + CSW
# Layout: point clouds are (D, N) = (3, 128)  -> N on the 128-wide lane axis.
# Params / optimizer state are (1, 1) values (vregs); all transcendentals run on
# the VPU/EUP (no scalar-unit exp/log/sqrt).
# ----------------------------------------------------------------------------
def _mcsw_train_kernel(p_ref, x_ref, y_ref, xt_ref, yt_ref, stats_ref,
                       *, num_iters, n_points):
    inv_n = 1.0 / float(n_points)
    inv_nd = 1.0 / (float(n_points) * 3.0)

    def ps(i):                               # (1,1) "vector scalar" from packed row
        return p_ref[0:1, i:i + 1]

    u0 = [ps(0), ps(1), ps(2)]
    w0 = [ps(3), ps(4), ps(5)]
    b0 = ps(6)
    lam, lr, wd = ps(7), ps(8), ps(9)

    # Lane-dense rows: coordinate k of all points -> (1, N)
    x = [x_ref[0:1, :], x_ref[1:2, :], x_ref[2:3, :]]
    y = [y_ref[0:1, :], y_ref[1:2, :], y_ref[2:3, :]]

    def u_hat(u, w):
        inner = u[0] * w[0] + u[1] * w[1] + u[2] * w[2]                 # (1,1)
        sp = jnp.maximum(inner, 0.0) + jnp.log(1.0 + jnp.exp(-jnp.abs(inner)))
        sig = 1.0 / (1.0 + jnp.exp(-inner))
        w2 = w[0] * w[0] + w[1] * w[1] + w[2] * w[2]
        alpha = (sp - 1.0 - inner) / w2
        uh = [u[k] + alpha * w[k] for k in range(3)]
        return uh, alpha, sig, w2

    def flow(uh, w, b, z):
        lin = w[0] * z[0] + w[1] * z[1] + w[2] * z[2] + b               # (1,N)
        t = jnp.tanh(lin)
        return [z[k] + uh[k] * t for k in range(3)], t

    def csw_terms(a, c):
        d = a[0] * c[0] + a[1] * c[1] + a[2] * c[2]
        p = a[0] * a[0] + a[1] * a[1] + a[2] * a[2]
        q = c[0] * c[0] + c[1] * c[1] + c[2] * c[2]
        r = lax.rsqrt(p * q + _COS_EPS)
        return d, p, q, r

    def rsum(v):                              # (1,N) -> (1,1) lane reduce
        return jnp.sum(v, axis=-1, keepdims=True)

    zero = jnp.zeros((1, 1), jnp.float32)
    params = u0 + w0 + [b0]                   # [u0,u1,u2,w0,w1,w2,b] as (1,1)s
    m = [zero] * 7
    v = [zero] * 7

    # ---------------- unrolled Adam training loop (analytic D=3 gradients) ----
    for step in range(num_iters):
        pu, pw, pb = params[0:3], params[3:6], params[6]
        uh, alpha, sig, w2 = u_hat(pu, pw)
        ax, tx = flow(uh, pw, pb, x)
        ay, ty = flow(uh, pw, pb, y)
        d, p, q, r = csw_terms(ax, ay)
        r3 = r * r * r
        inv_nx = lax.rsqrt(p)
        inv_ny = lax.rsqrt(q)
        nx = p * inv_nx                       # ||phi(x_i)||
        ny = q * inv_ny
        sgn_x = jnp.where(nx > 1.0, 1.0, jnp.where(nx < 1.0, -1.0, 0.0))
        sgn_y = jnp.where(ny > 1.0, 1.0, jnp.where(ny < 1.0, -1.0, 0.0))
        cx = (lam * inv_nd) * (sgn_x * inv_nx)        # reg-term scale, (1,N)
        cy = (lam * inv_nd) * (sgn_y * inv_ny)
        dqr3 = d * q * r3
        dpr3 = d * p * r3
        # dL/d(transformed points):  loss = lam*reg - (1 - mean(cos))
        gx = [cx * ax[k] + inv_n * (ay[k] * r - dqr3 * ax[k]) for k in range(3)]
        gy = [cy * ay[k] + inv_n * (ax[k] * r - dpr3 * ay[k]) for k in range(3)]
        # chain to u_hat / b / w(lin)
        g_uh = [rsum(gx[k] * tx + gy[k] * ty) for k in range(3)]
        dtx = 1.0 - tx * tx
        dty = 1.0 - ty * ty
        sx = (gx[0] * uh[0] + gx[1] * uh[1] + gx[2] * uh[2]) * dtx      # (g.u_hat) h'
        sy = (gy[0] * uh[0] + gy[1] * uh[1] + gy[2] * uh[2]) * dty
        g_b = rsum(sx + sy)
        gw_dir = [rsum(sx * x[k] + sy * y[k]) for k in range(3)]
        # chain through u_hat(u, w) = u + alpha(w,u) * w
        w_dot_guh = pw[0] * g_uh[0] + pw[1] * g_uh[1] + pw[2] * g_uh[2]
        sig_m1 = sig - 1.0
        inv_w2 = 1.0 / w2
        g_u = [g_uh[k] + w_dot_guh * sig_m1 * pw[k] * inv_w2 for k in range(3)]
        g_w = [gw_dir[k] + alpha * g_uh[k]
               + w_dot_guh * (sig_m1 * pu[k] - 2.0 * alpha * pw[k]) * inv_w2
               for k in range(3)]
        grads = g_u + g_w + [g_b]

        # Adam (torch semantics: coupled weight decay + bias correction); the
        # step index is static so bias corrections are compile-time constants.
        bc1 = 1.0 - _B1 ** (step + 1)
        bc2 = 1.0 - _B2 ** (step + 1)
        new_params, new_m, new_v = [], [], []
        for pk, gk, mk, vk in zip(params, grads, m, v):
            gk = gk + wd * pk
            mk = _B1 * mk + (1.0 - _B1) * gk
            vk = _B2 * vk + (1.0 - _B2) * (gk * gk)
            upd = (mk / bc1) / (jnp.sqrt(vk / bc2) + _ADAM_EPS)
            new_params.append(pk - lr * upd)
            new_m.append(mk)
            new_v.append(vk)
        params, m, v = new_params, new_m, new_v

    # ---------------- final pass with trained params ---------------------------
    pu, pw, pb = params[0:3], params[3:6], params[6]
    uh, _, _, _ = u_hat(pu, pw)
    ax, _ = flow(uh, pw, pb, x)
    ay, _ = flow(uh, pw, pb, y)

    # Per-row (1,N) stores; executed once after training so their cost is noise.
    xt_ref[0:1, :] = ax[0]
    xt_ref[1:2, :] = ax[1]
    xt_ref[2:3, :] = ax[2]
    yt_ref[0:1, :] = ay[0]
    yt_ref[1:2, :] = ay[1]
    yt_ref[2:3, :] = ay[2]

    d, p, q, r = csw_terms(ax, ay)
    cswd = 1.0 - rsum(d * r) * inv_n                                   # (1,1)
    stats_ref[0:1, 0:1] = cswd
    for k in range(3):
        stats_ref[0:1, 1 + k:2 + k] = params[k]          # trained u
        stats_ref[0:1, 4 + k:5 + k] = params[3 + k]      # trained w
    stats_ref[0:1, 7:8] = params[6]                      # trained b


def _planar_csw_train_call(xT, yT, packed, *, num_iters):
    d, n = xT.shape
    kernel = functools.partial(_mcsw_train_kernel, num_iters=num_iters, n_points=n)
    return pl.pallas_call(
        kernel,
        out_shape=(jax.ShapeDtypeStruct((d, n), jnp.float32),   # phi(first)^T
                   jax.ShapeDtypeStruct((d, n), jnp.float32),   # phi(second)^T
                   jax.ShapeDtypeStruct((1, 8), jnp.float32)),  # [cswd, u, w, b]
        in_specs=[pl.BlockSpec(memory_space=pltpu.MemorySpace.VMEM)] * 3,
        out_specs=(pl.BlockSpec(memory_space=pltpu.MemorySpace.VMEM),) * 3,
    )(packed, xT, yT)


# ----------------------------------------------------------------------------
# Single fused jitted program: pack params -> one pallas_call -> unpack.
# ----------------------------------------------------------------------------
@functools.partial(jax.jit, static_argnames=("num_iters",))
def _mcsw_fused(first, second, u, w, b, lam, lr, wd, num_iters):
    first = first.astype(jnp.float32)
    second = second.astype(jnp.float32)
    packed = jnp.concatenate(
        [u.reshape(-1), w.reshape(-1), b.reshape(-1),
         jnp.stack([lam, lr, wd])]).astype(jnp.float32).reshape(1, 10)
    xt, yt, stats = _planar_csw_train_call(first.T, second.T, packed,
                                           num_iters=num_iters)
    return stats[0, 0], xt.T, yt.T, stats[0, 1:8]


# ----------------------------------------------------------------------------
# Deterministic Planar-flow init (normflows.flows.Planar defaults)
# ----------------------------------------------------------------------------
def init_planar_params(key, dim=3):
    ku, kw = jax.random.split(key)
    lim_w = (2.0 / dim) ** 0.5
    lim_u = 2.0 ** 0.5
    u = jax.random.uniform(ku, (dim,), jnp.float32, -lim_u, lim_u)
    w = jax.random.uniform(kw, (dim,), jnp.float32, -lim_w, lim_w)
    b = jnp.zeros((1,), jnp.float32)
    return u, w, b


# ----------------------------------------------------------------------------
# forward() — mirrors max_cos_similarity_wassersten_distance_refresh.forward
# ----------------------------------------------------------------------------
def mcsw_forward(first_samples, second_samples, key, train_or_test="train",
                 max_iter=10, lam=0.1,
                 phi_op_lr=0.000340383810478616,
                 phi_op_weight_decay=9.366845209461106e-10):
    n, d = first_samples.shape
    assert d == 3, "Planar flow in the module is built with input_dim=3"
    u, w, b = init_planar_params(key, d)
    num_iters = max_iter if train_or_test == "train" else 0
    cswd, ft, st, _ = _mcsw_fused(
        first_samples, second_samples, u, w, b,
        jnp.float32(lam), jnp.float32(phi_op_lr),
        jnp.float32(phi_op_weight_decay), num_iters)
    return cswd, ft, st


# ----------------------------------------------------------------------------
# Pure-JAX reference (jax.grad + Adam) used ONLY to validate the kernel trainer.
# Numerically mirrors the in-kernel math (same softplus / rsqrt / reg formulas).
# ----------------------------------------------------------------------------
def _softplus_stable(x):
    return jnp.maximum(x, 0.0) + jnp.log(1.0 + jnp.exp(-jnp.abs(x)))


def _ref_u_hat(u, w):
    inner = jnp.sum(u * w)
    return u + (_softplus_stable(inner) - 1.0 - inner) * w / jnp.sum(w * w)


def _ref_flow(u, w, b, z):                                   # z: (N, 3)
    uh = _ref_u_hat(u, w)
    lin = z @ w + b[0]                                       # (N,)
    return z + uh[None, :] * jnp.tanh(lin)[:, None]


def _ref_csw(a, c):
    d = jnp.sum(a * c, axis=-1)
    p = jnp.sum(a * a, axis=-1)
    q = jnp.sum(c * c, axis=-1)
    return 1.0 - jnp.mean(d * lax.rsqrt(p * q + _COS_EPS))


def _ref_reg(a):
    return jnp.sum(jnp.abs(jnp.sqrt(jnp.sum(a * a, axis=-1)) - 1.0)) / (
        a.shape[0] * a.shape[1])


def _ref_loss(pvec, x, y, lam):
    u, w, b = pvec[0:3], pvec[3:6], pvec[6:7]
    a = _ref_flow(u, w, b, x)
    c = _ref_flow(u, w, b, y)
    return lam * (_ref_reg(a) + _ref_reg(c)) - _ref_csw(a, c)


@functools.partial(jax.jit, static_argnames=("num_iters",))
def _ref_forward(x, y, u, w, b, lam, lr, wd, num_iters):
    x = x.astype(jnp.float32)
    y = y.astype(jnp.float32)
    pvec = jnp.concatenate([u, w, b]).astype(jnp.float32)
    grad_fn = jax.grad(_ref_loss)
    m = jnp.zeros_like(pvec)
    v = jnp.zeros_like(pvec)
    for t in range(num_iters):
        g = grad_fn(pvec, x, y, lam) + wd * pvec
        m = _B1 * m + (1.0 - _B1) * g
        v = _B2 * v + (1.0 - _B2) * (g * g)
        bc1 = 1.0 - _B1 ** (t + 1)
        bc2 = 1.0 - _B2 ** (t + 1)
        pvec = pvec - lr * (m / bc1) / (jnp.sqrt(v / bc2) + _ADAM_EPS)
    u_, w_, b_ = pvec[0:3], pvec[3:6], pvec[6:7]
    a = _ref_flow(u_, w_, b_, x)
    c = _ref_flow(u_, w_, b_, y)
    return _ref_csw(a, c), a, c, pvec


# ----------------------------------------------------------------------------
if __name__ == "__main__":
    key = jax.random.PRNGKey(0)
    k1, k2, k3 = jax.random.split(key, 3)

    N, D = 128, 3                      # 128 points in 3-D (Planar flow input_dim=3)
    first = jax.random.normal(k1, (N, D), jnp.float32)
    second = jax.random.normal(k2, (N, D), jnp.float32)
    u0, w0, b0 = init_planar_params(k3, D)

    LAM = jnp.float32(0.1)
    LR = jnp.float32(0.000340383810478616)
    WD = jnp.float32(9.366845209461106e-10)

    # 1) "test" path (num_iters=0): kernel forward+CSW vs pure-JAX mirror.
    cswd_k, ft_k, st_k, p_k = _mcsw_fused(first, second, u0, w0, b0, LAM, LR, WD, 0)
    cswd_r, ft_r, st_r, p_r = _ref_forward(first, second, u0, w0, b0, LAM, LR, WD, 0)
    jax.block_until_ready((cswd_k, ft_k, st_k, p_k))
    assert bool(jnp.allclose(ft_k, ft_r, atol=1e-4, rtol=1e-4))
    assert bool(jnp.allclose(st_k, st_r, atol=1e-4, rtol=1e-4))
    assert bool(jnp.allclose(cswd_k, cswd_r, atol=5e-4))

    # 2) "train" path: 10 in-kernel Adam steps (analytic grads) vs jax.grad trainer.
    cswd_k, ft_k, st_k, p_k = _mcsw_fused(first, second, u0, w0, b0, LAM, LR, WD, 10)
    cswd_r, ft_r, st_r, p_r = _ref_forward(first, second, u0, w0, b0, LAM, LR, WD, 10)
    jax.block_until_ready((cswd_k, ft_k, st_k, p_k))
    assert bool(jnp.allclose(p_k, p_r, atol=2e-4))
    assert bool(jnp.allclose(ft_k, ft_r, atol=2e-4, rtol=1e-3))
    assert bool(jnp.allclose(st_k, st_r, atol=2e-4, rtol=1e-3))
    assert bool(jnp.allclose(cswd_k, cswd_r, atol=5e-4))
    assert bool(jnp.isfinite(cswd_k))

    # 3) public forward smoke test (module-equivalent entry point).
    cswd, ft, st = mcsw_forward(first, second, k3, train_or_test="train")
    jax.block_until_ready((cswd, ft, st))
    assert ft.shape == (N, D) and st.shape == (N, D)

    print("KERNEL_OK")
</pallas_src>

<mosaic_0001>
module attributes {stable_mosaic.version = 11 : i64} {
  func.func @_mcsw_train_kernel(%arg0: memref<1x10xf32, #tpu.memory_space<vmem>>, %arg1: memref<3x128xf32, #tpu.memory_space<vmem>>, %arg2: memref<3x128xf32, #tpu.memory_space<vmem>>, %arg3: memref<3x128xf32, #tpu.memory_space<vmem>>, %arg4: memref<3x128xf32, #tpu.memory_space<vmem>>, %arg5: memref<1x8xf32, #tpu.memory_space<vmem>>) attributes {dimension_semantics = [], scalar_prefetch = 0 : i64, scratch_operands = 0 : i64, tpu.core_type = #tpu.core_type<tc>} {
    %c0 = arith.constant 0 : index
    %c0_0 = arith.constant 0 : index
    %0 = vector.load %arg0[%c0, %c0_0] : memref<1x10xf32, #tpu.memory_space<vmem>>, vector<1x1xf32>
    %c0_1 = arith.constant 0 : index
    %c1 = arith.constant 1 : index
    %1 = vector.load %arg0[%c0_1, %c1] : memref<1x10xf32, #tpu.memory_space<vmem>>, vector<1x1xf32>
    %c0_2 = arith.constant 0 : index
    %c2 = arith.constant 2 : index
    %2 = vector.load %arg0[%c0_2, %c2] : memref<1x10xf32, #tpu.memory_space<vmem>>, vector<1x1xf32>
    %c0_3 = arith.constant 0 : index
    %c3 = arith.constant 3 : index
    %3 = vector.load %arg0[%c0_3, %c3] : memref<1x10xf32, #tpu.memory_space<vmem>>, vector<1x1xf32>
    %c0_4 = arith.constant 0 : index
    %c4 = arith.constant 4 : index
    %4 = vector.load %arg0[%c0_4, %c4] : memref<1x10xf32, #tpu.memory_space<vmem>>, vector<1x1xf32>
    %c0_5 = arith.constant 0 : index
    %c5 = arith.constant 5 : index
    %5 = vector.load %arg0[%c0_5, %c5] : memref<1x10xf32, #tpu.memory_space<vmem>>, vector<1x1xf32>
    %c0_6 = arith.constant 0 : index
    %c6 = arith.constant 6 : index
    %6 = vector.load %arg0[%c0_6, %c6] : memref<1x10xf32, #tpu.memory_space<vmem>>, vector<1x1xf32>
    %c0_7 = arith.constant 0 : index
    %c0_8 = arith.constant 0 : index
    %7 = vector.load %arg1[%c0_7, %c0_8] : memref<3x128xf32, #tpu.memory_space<vmem>>, vector<1x128xf32>
    %c1_9 = arith.constant 1 : index
    %c0_10 = arith.constant 0 : index
    %8 = vector.load %arg1[%c1_9, %c0_10] : memref<3x128xf32, #tpu.memory_space<vmem>>, vector<1x128xf32>
    %c2_11 = arith.constant 2 : index
    %c0_12 = arith.constant 0 : index
    %9 = vector.load %arg1[%c2_11, %c0_12] : memref<3x128xf32, #tpu.memory_space<vmem>>, vector<1x128xf32>
    %c0_13 = arith.constant 0 : index
    %c0_14 = arith.constant 0 : index
    %10 = vector.load %arg2[%c0_13, %c0_14] : memref<3x128xf32, #tpu.memory_space<vmem>>, vector<1x128xf32>
    %c1_15 = arith.constant 1 : index
    %c0_16 = arith.constant 0 : index
    %11 = vector.load %arg2[%c1_15, %c0_16] : memref<3x128xf32, #tpu.memory_space<vmem>>, vector<1x128xf32>
    %c2_17 = arith.constant 2 : index
    %c0_18 = arith.constant 0 : index
    %12 = vector.load %arg2[%c2_17, %c0_18] : memref<3x128xf32, #tpu.memory_space<vmem>>, vector<1x128xf32>
    %13 = arith.mulf %0, %3 : vector<1x1xf32>
    %14 = arith.mulf %1, %4 : vector<1x1xf32>
    %15 = arith.addf %13, %14 : vector<1x1xf32>
    %16 = arith.mulf %2, %5 : vector<1x1xf32>
    %17 = arith.addf %15, %16 : vector<1x1xf32>
    %cst = arith.constant 0.000000e+00 : f32
    %18 = vector.broadcast %cst : f32 to vector<1x1xf32>
    %19 = arith.maximumf %17, %18 : vector<1x1xf32>
    %20 = math.absf %17 : vector<1x1xf32>
    %cst_19 = arith.constant 0.000000e+00 : f32
    %21 = vector.broadcast %cst_19 : f32 to vector<1x1xf32>
    %22 = arith.subf %21, %20 : vector<1x1xf32>
    %23 = math.exp %22 : vector<1x1xf32>
    %cst_20 = arith.constant 1.000000e+00 : f32
    %24 = vector.broadcast %cst_20 : f32 to vector<1x1xf32>
    %25 = arith.addf %24, %23 : vector<1x1xf32>
    %26 = math.log %25 : vector<1x1xf32>
    %27 = arith.addf %19, %26 : vector<1x1xf32>
    %28 = arith.mulf %3, %3 : vector<1x1xf32>
    %29 = arith.mulf %4, %4 : vector<1x1xf32>
    %30 = arith.addf %28, %29 : vector<1x1xf32>
    %31 = arith.mulf %5, %5 : vector<1x1xf32>
    %32 = arith.addf %30, %31 : vector<1x1xf32>
    %cst_21 = arith.constant 1.000000e+00 : f32
    %33 = vector.broadcast %cst_21 : f32 to vector<1x1xf32>
    %34 = arith.subf %27, %33 : vector<1x1xf32>
    %35 = arith.subf %34, %17 : vector<1x1xf32>
    %36 = arith.divf %35, %32 : vector<1x1xf32>
    %37 = arith.mulf %36, %3 : vector<1x1xf32>
    %38 = arith.addf %0, %37 : vector<1x1xf32>
    %39 = arith.mulf %36, %4 : vector<1x1xf32>
    %40 = arith.addf %1, %39 : vector<1x1xf32>
    %41 = arith.mulf %36, %5 : vector<1x1xf32>
    %42 = arith.addf %2, %41 : vector<1x1xf32>
    %43 = vector.broadcast %3 : vector<1x1xf32> to vector<1x128xf32>
    %44 = arith.mulf %43, %7 : vector<1x128xf32>
    %45 = vector.broadcast %4 : vector<1x1xf32> to vector<1x128xf32>
    %46 = arith.mulf %45, %8 : vector<1x128xf32>
    %47 = arith.addf %44, %46 : vector<1x128xf32>
    %48 = vector.broadcast %5 : vector<1x1xf32> to vector<1x128xf32>
    %49 = arith.mulf %48, %9 : vector<1x128xf32>
    %50 = arith.addf %47, %49 : vector<1x128xf32>
    %51 = vector.broadcast %6 : vector<1x1xf32> to vector<1x128xf32>
    %52 = arith.addf %50, %51 : vector<1x128xf32>
    %53 = math.tanh %52 : vector<1x128xf32>
    %54 = vector.broadcast %38 : vector<1x1xf32> to vector<1x128xf32>
    %55 = arith.mulf %54, %53 : vector<1x128xf32>
    %56 = arith.addf %7, %55 : vector<1x128xf32>
    %57 = vector.broadcast %40 : vector<1x1xf32> to vector<1x128xf32>
    %58 = arith.mulf %57, %53 : vector<1x128xf32>
    %59 = arith.addf %8, %58 : vector<1x128xf32>
    %60 = vector.broadcast %42 : vector<1x1xf32> to vector<1x128xf32>
    %61 = arith.mulf %60, %53 : vector<1x128xf32>
    %62 = arith.addf %9, %61 : vector<1x128xf32>
    %63 = vector.broadcast %3 : vector<1x1xf32> to vector<1x128xf32>
    %64 = arith.mulf %63, %10 : vector<1x128xf32>
    %65 = vector.broadcast %4 : vector<1x1xf32> to vector<1x128xf32>
    %66 = arith.mulf %65, %11 : vector<1x128xf32>
    %67 = arith.addf %64, %66 : vector<1x128xf32>
    %68 = vector.broadcast %5 : vector<1x1xf32> to vector<1x128xf32>
    %69 = arith.mulf %68, %12 : vector<1x128xf32>
    %70 = arith.addf %67, %69 : vector<1x128xf32>
    %71 = vector.broadcast %6 : vector<1x1xf32> to vector<1x128xf32>
    %72 = arith.addf %70, %71 : vector<1x128xf32>
    %73 = math.tanh %72 : vector<1x128xf32>
    %74 = vector.broadcast %38 : vector<1x1xf32> to vector<1x128xf32>
    %75 = arith.mulf %74, %73 : vector<1x128xf32>
    %76 = arith.addf %10, %75 : vector<1x128xf32>
    %77 = vector.broadcast %40 : vector<1x1xf32> to vector<1x128xf32>
    %78 = arith.mulf %77, %73 : vector<1x128xf32>
    %79 = arith.addf %11, %78 : vector<1x128xf32>
    %80 = vector.broadcast %42 : vector<1x1xf32> to vector<1x128xf32>
    %81 = arith.mulf %80, %73 : vector<1x128xf32>
    %82 = arith.addf %12, %81 : vector<1x128xf32>
    %c0_22 = arith.constant 0 : index
    %c0_23 = arith.constant 0 : index
    %83 = vector.load %arg3[%c0_22, %c0_23] : memref<3x128xf32, #tpu.memory_space<vmem>>, vector<1x128xf32>
    tpu.vector_store %arg3[%c0_22, %c0_23], %56 {strides = array<i32>} : memref<3x128xf32, #tpu.memory_space<vmem>>, vector<1x128xf32>,
    %c1_24 = arith.constant 1 : index
    %c0_25 = arith.constant 0 : index
    %84 = vector.load %arg3[%c1_24, %c0_25] : memref<3x128xf32, #tpu.memory_space<vmem>>, vector<1x128xf32>
    tpu.vector_store %arg3[%c1_24, %c0_25], %59 {strides = array<i32>} : memref<3x128xf32, #tpu.memory_space<vmem>>, vector<1x128xf32>,
    %c2_26 = arith.constant 2 : index
    %c0_27 = arith.constant 0 : index
    %85 = vector.load %arg3[%c2_26, %c0_27] : memref<3x128xf32, #tpu.memory_space<vmem>>, vector<1x128xf32>
    tpu.vector_store %arg3[%c2_26, %c0_27], %62 {strides = array<i32>} : memref<3x128xf32, #tpu.memory_space<vmem>>, vector<1x128xf32>,
    %c0_28 = arith.constant 0 : index
    %c0_29 = arith.constant 0 : index
    %86 = vector.load %arg4[%c0_28, %c0_29] : memref<3x128xf32, #tpu.memory_space<vmem>>, vector<1x128xf32>
    tpu.vector_store %arg4[%c0_28, %c0_29], %76 {strides = array<i32>} : memref<3x128xf32, #tpu.memory_space<vmem>>, vector<1x128xf32>,
    %c1_30 = arith.constant 1 : index
    %c0_31 = arith.constant 0 : index
    %87 = vector.load %arg4[%c1_30, %c0_31] : memref<3x128xf32, #tpu.memory_space<vmem>>, vector<1x128xf32>
    tpu.vector_store %arg4[%c1_30, %c0_31], %79 {strides = array<i32>} : memref<3x128xf32, #tpu.memory_space<vmem>>, vector<1x128xf32>,
    %c2_32 = arith.constant 2 : index
    %c0_33 = arith.constant 0 : index
    %88 = vector.load %arg4[%c2_32, %c0_33] : memref<3x128xf32, #tpu.memory_space<vmem>>, vector<1x128xf32>
    tpu.vector_store %arg4[%c2_32, %c0_33], %82 {strides = array<i32>} : memref<3x128xf32, #tpu.memory_space<vmem>>, vector<1x128xf32>,
    %89 = arith.mulf %56, %76 : vector<1x128xf32>
    %90 = arith.mulf %59, %79 : vector<1x128xf32>
    %91 = arith.addf %89, %90 : vector<1x128xf32>
    %92 = arith.mulf %62, %82 : vector<1x128xf32>
    %93 = arith.addf %91, %92 : vector<1x128xf32>
    %94 = arith.mulf %56, %56 : vector<1x128xf32>
    %95 = arith.mulf %59, %59 : vector<1x128xf32>
    %96 = arith.addf %94, %95 : vector<1x128xf32>
    %97 = arith.mulf %62, %62 : vector<1x128xf32>
    %98 = arith.addf %96, %97 : vector<1x128xf32>
    %99 = arith.mulf %76, %76 : vector<1x128xf32>
    %100 = arith.mulf %79, %79 : vector<1x128xf32>
    %101 = arith.addf %99, %100 : vector<1x128xf32>
    %102 = arith.mulf %82, %82 : vector<1x128xf32>
    %103 = arith.addf %101, %102 : vector<1x128xf32>
    %104 = arith.mulf %98, %103 : vector<1x128xf32>
    %cst_34 = arith.constant 1.000000e-16 : f32
    %105 = vector.broadcast %cst_34 : f32 to vector<1x128xf32>
    %106 = arith.addf %104, %105 : vector<1x128xf32>
    %107 = math.rsqrt %106 : vector<1x128xf32>
    %108 = arith.mulf %93, %107 : vector<1x128xf32>
    %cst_35 = arith.constant dense<0.000000e+00> : vector<1xf32>
    %109 = vector.multi_reduction <add>, %108, %cst_35 [1] : vector<1x128xf32> to vector<1xf32>
    %110 = vector.shape_cast %109 : vector<1xf32> to vector<1x1xf32>
    %cst_36 = arith.constant 7.812500e-03 : f32
    %111 = vector.broadcast %cst_36 : f32 to vector<1x1xf32>
    %112 = arith.mulf %110, %111 : vector<1x1xf32>
    %cst_37 = arith.constant 1.000000e+00 : f32
    %113 = vector.broadcast %cst_37 : f32 to vector<1x1xf32>
    %114 = arith.subf %113, %112 : vector<1x1xf32>
    %c0_38 = arith.constant 0 : index
    %c0_39 = arith.constant 0 : index
    %115 = vector.load %arg5[%c0_38, %c0_39] : memref<1x8xf32, #tpu.memory_space<vmem>>, vector<1x1xf32>
    tpu.vector_store %arg5[%c0_38, %c0_39], %114 {strides = array<i32>} : memref<1x8xf32, #tpu.memory_space<vmem>>, vector<1x1xf32>,
    %c0_40 = arith.constant 0 : index
    %c1_41 = arith.constant 1 : index
    %116 = vector.load %arg5[%c0_40, %c1_41] : memref<1x8xf32, #tpu.memory_space<vmem>>, vector<1x1xf32>
    tpu.vector_store %arg5[%c0_40, %c1_41], %0 {strides = array<i32>} : memref<1x8xf32, #tpu.memory_space<vmem>>, vector<1x1xf32>,
    %c0_42 = arith.constant 0 : index
    %c4_43 = arith.constant 4 : index
    %117 = vector.load %arg5[%c0_42, %c4_43] : memref<1x8xf32, #tpu.memory_space<vmem>>, vector<1x1xf32>
    tpu.vector_store %arg5[%c0_42, %c4_43], %3 {strides = array<i32>} : memref<1x8xf32, #tpu.memory_space<vmem>>, vector<1x1xf32>,
    %c0_44 = arith.constant 0 : index
    %c2_45 = arith.constant 2 : index
    %118 = vector.load %arg5[%c0_44, %c2_45] : memref<1x8xf32, #tpu.memory_space<vmem>>, vector<1x1xf32>
    tpu.vector_store %arg5[%c0_44, %c2_45], %1 {strides = array<i32>} : memref<1x8xf32, #tpu.memory_space<vmem>>, vector<1x1xf32>,
    %c0_46 = arith.constant 0 : index
    %c5_47 = arith.constant 5 : index
    %119 = vector.load %arg5[%c0_46, %c5_47] : memref<1x8xf32, #tpu.memory_space<vmem>>, vector<1x1xf32>
    tpu.vector_store %arg5[%c0_46, %c5_47], %4 {strides = array<i32>} : memref<1x8xf32, #tpu.memory_space<vmem>>, vector<1x1xf32>,
    %c0_48 = arith.constant 0 : index
    %c3_49 = arith.constant 3 : index
    %120 = vector.load %arg5[%c0_48, %c3_49] : memref<1x8xf32, #tpu.memory_space<vmem>>, vector<1x1xf32>
    tpu.vector_store %arg5[%c0_48, %c3_49], %2 {strides = array<i32>} : memref<1x8xf32, #tpu.memory_space<vmem>>, vector<1x1xf32>,
    %c0_50 = arith.constant 0 : index
    %c6_51 = arith.constant 6 : index
    %121 = vector.load %arg5[%c0_50, %c6_51] : memref<1x8xf32, #tpu.memory_space<vmem>>, vector<1x1xf32>
    tpu.vector_store %arg5[%c0_50, %c6_51], %5 {strides = array<i32>} : memref<1x8xf32, #tpu.memory_space<vmem>>, vector<1x1xf32>,
    %c0_52 = arith.constant 0 : index
    %c7 = arith.constant 7 : index
    %122 = vector.load %arg5[%c0_52, %c7] : memref<1x8xf32, #tpu.memory_space<vmem>>, vector<1x1xf32>
    tpu.vector_store %arg5[%c0_52, %c7], %6 {strides = array<i32>} : memref<1x8xf32, #tpu.memory_space<vmem>>, vector<1x1xf32>,
    return
  }
}

</mosaic_0001>

<llo_original>
// kernel: _mcsw_fused.1
$region0: #{_mcsw_fused.1}
  #allocation0 [shape = 'u32[]', space=smem, size = 0x4, offset = 0x4, fixed_abs, tag = 'smem constant byte address 0x4 - core index']
  #allocation1 [shape = 'u32[144,128]{1,0:T(1,128)}', space=vmem, size = 0x12000, scoped, tag = 'internal scratch']
  %s0 = inlined_call_operand.vmem [shape: f32[1,10], index: 0, kind: input, shape index: {}]
  %s1 = inlined_call_operand.vmem [shape: f32[3,128], index: 1, kind: input, shape index: {}]
  %s2 = inlined_call_operand.vmem [shape: f32[3,128], index: 2, kind: input, shape index: {}]
  %s3 = inlined_call_operand.hbm [shape: f32[3,128], index: 3, kind: output, shape index: {0}]
  %s4 = inlined_call_operand.hbm [shape: f32[3,128], index: 4, kind: output, shape index: {1}]
  %s5 = inlined_call_operand.vmem [shape: f32[1,8], index: 5, kind: output, shape index: {2}]
  %6 = xla_tuple %s3, %s4, %s5
  %s7 = sld [smem:[#allocation0]]
  $region38: #{_mcsw_fused.1} parent=0
    _
  %s9 = ssub.s32 1, %s7
  %s10 = scalar_select 0, %s9, %s7
  $region1: #{_mcsw_fused.1} parent=0
    #allocation2 [shape = 'u8[2048]{0}', space=vmem, size = 0x800, scoped, tag = 'output window, operand 0, single buffered']
    #allocation3 [shape = 's32[1]{0}', space=sflag, size = 0x4, scoped, tag = 'scoped memory for _mcsw_fused.1']
    #allocation4 [shape = 'u8[2048]{0}', space=vmem, size = 0x800, scoped, tag = 'output window, operand 1, single buffered']
    #allocation5 [shape = 's32[1]{0}', space=sflag, size = 0x4, scoped, tag = 'scoped memory for _mcsw_fused.1']
    %11 = vsyncpa [#allocation3], 0
    %12 = vsyncpa [#allocation5], 0
    // Predicated region
    $region2: #{_mcsw_fused.1} parent=1 // pred_check
      _
    $region3: #{_mcsw_fused.1} parent=1 // pred_check_branch
      %14 = sbr.rel (0) target = $region5
    $region4: #{_mcsw_fused.1} parent=1 // pred_region
      _
    $region5: #{_mcsw_fused.1} parent=1 // pred_fallthru
      _
    // Predicated region
    $region6: #{_mcsw_fused.1} parent=1 // pred_check
      _
    $region7: #{_mcsw_fused.1} parent=1 // pred_check_branch
      %16 = sbr.rel (0) target = $region9
    $region8: #{_mcsw_fused.1} parent=1 // pred_region
      _
    $region9: #{_mcsw_fused.1} parent=1 // pred_fallthru
      _
    // Predicated region
    $region10: #{_mcsw_fused.1} parent=1 // pred_check
      _
    $region11: #{_mcsw_fused.1} parent=1 // pred_check_branch
      %18 = sbr.rel (0) target = $region13
    $region12: #{_mcsw_fused.1} parent=1 // pred_region
      _
    $region13: #{_mcsw_fused.1} parent=1 // pred_fallthru
      _
    %v19 = vld [vmem:[%s0] sm:$0x1]
    %v20 = vld [vmem:[%s1] sm:$0x1]
    %v21 = vld [vmem:[%s1 + $0x1] sm:$0x1]
    %v22 = vld [vmem:[%s1 + $0x2] sm:$0x1]
    %v23 = vld [vmem:[%s2] sm:$0x1]
    %v24 = vld [vmem:[%s2 + $0x1] sm:$0x1]
    %v25 = vld [vmem:[%s2 + $0x2] sm:$0x1]
    %27 = vrot.lane.b32.xlu0 %v19, 125
    %v28 = vpop.permute.xlu0 %27
    %v30 = vmul.f32 %v19, %v28
    %32 = vrot.lane.b32.xlu0 %v30, 127
    %v33 = vpop.permute.xlu0 %32
    %v35 = vadd.f32 %v30, %v33
    %36 = vrot.lane.b32.xlu0 %v30, 126
    %v37 = vpop.permute.xlu0 %36
    %v39 = vadd.f32 %v35, %v37
    %v40 = vmax.f32 %v39, 0.0
    %v41 = vand.u32 2147483647, %v39
    %v42 = vsub.f32 0.0, %v41
    %v43 = vmul.f32 %v42, 1.442695
    %v44 = vpow.pop %v43
    %v45 = vadd.f32 %v44, 1.0
    %v46 = vlog2.pop %v45
    %v47 = vmul.f32 %v46, 0.6931472
    %v48 = vadd.f32 %v40, %v47
    %v49 = vmul.f32 %v19, %v19
    %51 = vrot.lane.b32.xlu0 %v49, 127
    %v52 = vpop.permute.xlu0 %51
    %v54 = vadd.f32 %v49, %v52
    %55 = vrot.lane.b32.xlu0 %v49, 126
    %v56 = vpop.permute.xlu0 %55
    %v58 = vadd.f32 %v54, %v56
    %v59 = vsub.f32 %v48, 1.0
    %v60 = vsub.f32 %v59, %v39
    %62 = vrot.lane.b32.xlu0 %v58, 125
    %v63 = vpop.permute.xlu0 %62
    %v65 = vrcp.pop %v63
    %v66 = vmul.f32 %v60, %v65
    %v67 = vmul.f32 %v66, %v28
    %v68 = vadd.f32 %v19, %v67
    %69 = vrot.lane.b32.xlu0 %v19, 124
    %v70 = vpop.permute.xlu0 %69
    %v72 = vmul.f32 %v66, %v70
    %74 = vrot.lane.b32.xlu0 %v72, 1
    %v75 = vpop.permute.xlu0 %74
    %v77 = vadd.f32 %v19, %v75
    %78 = vrot.lane.b32.xlu0 %v19, 123
    %v79 = vpop.permute.xlu0 %78
    %v81 = vmul.f32 %v66, %v79
    %83 = vrot.lane.b32.xlu0 %v81, 2
    %v84 = vpop.permute.xlu0 %83
    %v86 = vadd.f32 %v19, %v84
    %87 = vset.pattern.permute.xlu0 3
    %88 = vperm.xlu0 %87, %v19
    %v89 = vpop.permute.xlu0 %88
    %v91 = vlaneseq
    %v92 = vshrl.u32 %v91, 7
    %v93 = vsub.s32 0, %v92
    %v94 = vrot.slane %v89, %v93
    %v95 = vmul.f32 %v94, %v20
    %96 = vset.pattern.permute.xlu0 4
    %97 = vperm.xlu0 %96, %v19
    %v98 = vpop.permute.xlu0 %97
    %v100 = vlaneseq
    %v101 = vshrl.u32 %v100, 7
    %v102 = vsub.s32 0, %v101
    %v103 = vrot.slane %v98, %v102
    %v104 = vmul.f32 %v103, %v21
    %v105 = vadd.f32 %v95, %v104
    %106 = vset.pattern.permute.xlu0 5
    %107 = vperm.xlu0 %106, %v19
    %v108 = vpop.permute.xlu0 %107
    %v110 = vlaneseq
    %v111 = vshrl.u32 %v110, 7
    %v112 = vsub.s32 0, %v111
    %v113 = vrot.slane %v108, %v112
    %v114 = vmul.f32 %v113, %v22
    %v115 = vadd.f32 %v105, %v114
    %116 = vset.pattern.permute.xlu0 6
    %117 = vperm.xlu0 %116, %v19
    %v118 = vpop.permute.xlu0 %117
    %v120 = vlaneseq
    %v121 = vshrl.u32 %v120, 7
    %v122 = vsub.s32 0, %v121
    %v123 = vrot.slane %v118, %v122
    %v124 = vadd.f32 %v115, %v123
    %v125 = vtanh.pop %v124
    %127 = vset.pattern.permute.xlu0 0
    %128 = vperm.xlu0 %127, %v68
    %v129 = vpop.permute.xlu0 %128
    %v131 = vlaneseq
    %v132 = vshrl.u32 %v131, 7
    %v133 = vsub.s32 0, %v132
    %v134 = vrot.slane %v129, %v133
    %v135 = vmul.f32 %v134, %v125
    %v136 = vadd.f32 %v20, %v135
    %138 = vset.pattern.permute.xlu0 1
    %139 = vperm.xlu0 %138, %v77
    %v140 = vpop.permute.xlu0 %139
    %v142 = vlaneseq
    %v143 = vshrl.u32 %v142, 7
    %v144 = vsub.s32 0, %v143
    %v145 = vrot.slane %v140, %v144
    %v146 = vmul.f32 %v145, %v125
    %v147 = vadd.f32 %v21, %v146
    %149 = vset.pattern.permute.xlu0 2
    %150 = vperm.xlu0 %149, %v86
    %v151 = vpop.permute.xlu0 %150
    %v153 = vlaneseq
    %v154 = vshrl.u32 %v153, 7
    %v155 = vsub.s32 0, %v154
    %v156 = vrot.slane %v151, %v155
    %v157 = vmul.f32 %v156, %v125
    %v158 = vadd.f32 %v22, %v157
    %v159 = vmul.f32 %v94, %v23
    %v160 = vmul.f32 %v103, %v24
    %v161 = vadd.f32 %v159, %v160
    %v162 = vmul.f32 %v113, %v25
    %v163 = vadd.f32 %v161, %v162
    %v164 = vadd.f32 %v163, %v123
    %v165 = vtanh.pop %v164
    %v166 = vmul.f32 %v134, %v165
    %v167 = vadd.f32 %v23, %v166
    %v168 = vmul.f32 %v145, %v165
    %v169 = vadd.f32 %v24, %v168
    %v170 = vmul.f32 %v156, %v165
    %v171 = vadd.f32 %v25, %v170
    %172 = vst [vmem:[#allocation2] sm:$0x1] %v136
    %173 = vst [vmem:[#allocation2 + $0x1] sm:$0x1] %v147
    %174 = vst [vmem:[#allocation2 + $0x2] sm:$0x1] %v158
    %175 = vst [vmem:[#allocation4] sm:$0x1] %v167
    %176 = vst [vmem:[#allocation4 + $0x1] sm:$0x1] %v169
    %177 = vst [vmem:[#allocation4 + $0x2] sm:$0x1] %v171
    %v178 = vmul.f32 %v136, %v167
    %v179 = vmul.f32 %v147, %v169
    %v180 = vadd.f32 %v178, %v179
    %v181 = vmul.f32 %v158, %v171
    %v182 = vadd.f32 %v180, %v181
    %v183 = vmul.f32 %v136, %v136
    %v184 = vmul.f32 %v147, %v147
    %v185 = vadd.f32 %v183, %v184
    %v186 = vmul.f32 %v158, %v158
    %v187 = vadd.f32 %v185, %v186
    %v188 = vmul.f32 %v167, %v167
    %v189 = vmul.f32 %v169, %v169
    %v190 = vadd.f32 %v188, %v189
    %v191 = vmul.f32 %v171, %v171
    %v192 = vadd.f32 %v190, %v191
    %v193 = vmul.f32 %v187, %v192
    %v194 = vadd.f32 %v193, 1e-16
    %v195 = vrsqrt.pop %v194
    %v196 = vmul.f32 %v182, %v195
    %vm197 = vcmask 1040384
    %v198 = vsel %vm197, %v196, 0.0
    %199 = vadd.xlane.f32.xlu0 %v198
    %v200 = vpop.xlane.xlu0 %199
    %v201 = vmul.f32 %v200, 0.0078125
    %v202 = vsub.f32 1.0, %v201
    %vm203 = vcmask 0
    %204 = vst.msk [vmem:[%s5] sm:$0x1] %vm203, %v202
    %v205 = vlaneseq
    %v206 = vshrl.u32 %v205, 7
    %v207 = vsub.s32 0, %v206
    %v208 = vrot.slane %v19, %v207
    %209 = vrot.lane.b32.xlu0 %v208, 1
    %v210 = vpop.permute.xlu0 %209
    %vm212 = vcmask 8200
    %213 = vst.msk [vmem:[%s5] sm:$0x1] %vm212, %v210
    %vm214 = vcmask 32800
    %215 = vst.msk [vmem:[%s5] sm:$0x1] %vm214, %v210
    %vm216 = vcmask 16400
    %217 = vst.msk [vmem:[%s5] sm:$0x1] %vm216, %v210
    %vm218 = vcmask 41000
    %219 = vst.msk [vmem:[%s5] sm:$0x1] %vm218, %v210
    %vm220 = vcmask 24600
    %221 = vst.msk [vmem:[%s5] sm:$0x1] %vm220, %v210
    %vm222 = vcmask 49200
    %223 = vst.msk [vmem:[%s5] sm:$0x1] %vm222, %v210
    %vm224 = vcmask 57400
    %225 = vst.msk [vmem:[%s5] sm:$0x1] %vm224, %v210
    // Predicated region
    $region14: #{_mcsw_fused.1} parent=1 // pred_check
      _
    $region15: #{_mcsw_fused.1} parent=1 // pred_check_branch
      %227 = sbr.rel (0) target = $region17
    $region16: #{_mcsw_fused.1} parent=1 // pred_region
      %s229 = ssub.s32 64, 64
      %230 = vsyncadd [#allocation3], %s229
      %s232 = sshll.u32 [#allocation2], 4
      %s233 = int_to_ptr.vmem [resolvable:$true] %s232
      %235 = dma.vmem_to_hbm [thread:$0]  %s233, 64, %s3, [#allocation3]
    $region17: #{_mcsw_fused.1} parent=1 // pred_fallthru
      _
    // Predicated region
    $region18: #{_mcsw_fused.1} parent=1 // pred_check
      _
    $region19: #{_mcsw_fused.1} parent=1 // pred_check_branch
      %237 = sbr.rel (0) target = $region21
    $region20: #{_mcsw_fused.1} parent=1 // pred_region
      %s239 = ssub.s32 64, 64
      %240 = vsyncadd [#allocation5], %s239
      %s242 = sshll.u32 [#allocation4], 4
      %s243 = int_to_ptr.vmem [resolvable:$true] %s242
      %245 = dma.vmem_to_hbm [thread:$0]  %s243, 64, %s4, [#allocation5]
    $region21: #{_mcsw_fused.1} parent=1 // pred_fallthru
      _
    // Predicated region
    $region22: #{_mcsw_fused.1} parent=1 // pred_check
      _
    $region23: #{_mcsw_fused.1} parent=1 // pred_check_branch
      %247 = sbr.rel (0) target = $region25
    $region24: #{_mcsw_fused.1} parent=1 // pred_region
      _
    $region25: #{_mcsw_fused.1} parent=1 // pred_fallthru
      _
    // Predicated region
    $region26: #{_mcsw_fused.1} parent=1 // pred_check
      _
    $region27: #{_mcsw_fused.1} parent=1 // pred_check_branch
      %249 = sbr.rel (0) target = $region29
    $region28: #{_mcsw_fused.1} parent=1 // pred_region
      %250 = dma.done [#allocation3], 64
    $region29: #{_mcsw_fused.1} parent=1 // pred_fallthru
      _
    // Predicated region
    $region30: #{_mcsw_fused.1} parent=1 // pred_check
      _
    $region31: #{_mcsw_fused.1} parent=1 // pred_check_branch
      %252 = sbr.rel (0) target = $region33
    $region32: #{_mcsw_fused.1} parent=1 // pred_region
      %253 = dma.done [#allocation5], 64
    $region33: #{_mcsw_fused.1} parent=1 // pred_fallthru
      _
    // Predicated region
    $region34: #{_mcsw_fused.1} parent=1 // pred_check
      _
    $region35: #{_mcsw_fused.1} parent=1 // pred_check_branch
      %255 = sbr.rel (0) target = $region37
    $region36: #{_mcsw_fused.1} parent=1 // pred_region
      _
    $region37: #{_mcsw_fused.1} parent=1 // pred_fallthru
      _
    %256 = vsyncpa [#allocation3], 1
    %257 = vsyncpa [#allocation5], 1

</llo_original>
